<compile_context>
chip_gen: v7x
topology: tpu7x:2x2x1
jax: 0.10.0
libtpu: 0.0.40
codegen_flags: <defaults>
</compile_context>

<pallas_src>
import jax
import jax.numpy as jnp
from jax import lax
from jax.experimental import pallas as pl
from jax.experimental.pallas import tpu as pltpu


def character_encoder_kernel(x_ref, w1_ref, b1_ref, w2_ref, b2_ref,
                             w3_ref, b3_ref, w4_ref, b4_ref, o_ref):
    """Fused encoder -> L2 normalize -> decoder for one batch tile."""
    cdt = w1_ref.dtype          # matmul streaming dtype (f32 or bf16)

    x = x_ref[...]
    # Hoist bias loads (broadcasts are not CSE'd; load once per grid step).
    b1 = b1_ref[...]
    b2 = b2_ref[...]
    b3 = b3_ref[...]
    b4 = b4_ref[...]

    # Encoder: Linear -> ReLU -> Linear (f32 accumulation on the MXU).
    h = jnp.dot(x, w1_ref[...], preferred_element_type=jnp.float32) + b1
    h = jnp.maximum(h, 0.0)
    z = jnp.dot(h.astype(cdt), w2_ref[...],
                preferred_element_type=jnp.float32) + b2

    # F.normalize(p=2, dim=1): z / max(||z||_2, 1e-12) == z * rsqrt(max(||z||^2, 1e-24)).
    sumsq = jnp.sum(z * z, axis=1, keepdims=True)
    z = z * lax.rsqrt(jnp.maximum(sumsq, 1e-24))

    # Decoder: Linear -> ReLU -> Linear.
    h2 = jnp.dot(z.astype(cdt), w3_ref[...],
                 preferred_element_type=jnp.float32) + b3
    h2 = jnp.maximum(h2, 0.0)
    o = jnp.dot(h2.astype(cdt), w4_ref[...],
                preferred_element_type=jnp.float32) + b4
    o_ref[...] = o.astype(o_ref.dtype)


def character_encoder_forward(x, params, *, block_batch=1024,
                              compute_dtype=jnp.float32):
    """x: (B, T, E). Returns (B, T*E) float32.

    block_batch: max batch-tile rows per grid step (clamped / rounded to a
                 multiple of 8 as required by the (8,128) tiling rule).
    compute_dtype: dtype streamed through the MXU (f32 or bf16); accumulation
                 and all elementwise math stay f32.
    """
    B, T, E = x.shape
    inputs_size = T * E
    x_flat = x.reshape(B, inputs_size).astype(compute_dtype)   # view(-1, inputs_size)

    w1, b1, w2, b2, w3, b3, w4, b4 = params
    w1, w2, w3, w4 = (w.astype(compute_dtype) for w in (w1, w2, w3, w4))
    b1, b2, b3, b4 = (b.astype(jnp.float32) for b in (b1, b2, b3, b4))
    weight_operands = (w1, b1, w2, b2, w3, b3, w4, b4)

    # Batch tile size: full batch if tiny, else a multiple of 8 capped at block_batch.
    if B <= 8:
        tb = B
    else:
        tb = min(block_batch, B)
        tb -= tb % 8
    grid = (pl.cdiv(B, tb),)

    batch_map = lambda i: (i, 0)   # x / out stream over the batch axis
    const_map = lambda i: (0, 0)   # weights/biases resident across grid steps

    in_specs = [pl.BlockSpec((tb, inputs_size), batch_map)]
    in_specs += [pl.BlockSpec(w.shape, const_map) for w in weight_operands]
    out_spec = pl.BlockSpec((tb, inputs_size), batch_map)

    # Advisory cost estimate for XLA scheduling.
    n0, n1 = w1.shape[1], w2.shape[1]
    flops = 2 * B * (inputs_size * n0 + n0 * n1 + n1 * n0 + n0 * inputs_size)
    bytes_io = (x_flat.size * x_flat.dtype.itemsize
                + B * inputs_size * 4
                + sum(int(w.size) * w.dtype.itemsize for w in weight_operands))
    cost = pl.CostEstimate(flops=int(flops), transcendentals=int(B),
                           bytes_accessed=int(bytes_io))

    # Raise the scoped VMEM limit only when the tile actually needs it
    # (double-buffered x/out tiles + resident weights + slack).
    itemsize = jnp.dtype(compute_dtype).itemsize
    tile_bytes = tb * inputs_size * (2 * itemsize + 2 * 4)
    weight_bytes = sum(int(w.size) * w.dtype.itemsize for w in weight_operands)
    vmem_need = int((tile_bytes + weight_bytes) * 1.5) + (1 << 20)
    compiler_kwargs = dict(dimension_semantics=("parallel",))
    if vmem_need > (16 << 20):
        compiler_kwargs["vmem_limit_bytes"] = min(vmem_need, 56 << 20)

    return pl.pallas_call(
        character_encoder_kernel,
        out_shape=jax.ShapeDtypeStruct((B, inputs_size), jnp.float32),
        grid=grid,
        in_specs=in_specs,
        out_specs=out_spec,
        compiler_params=pltpu.CompilerParams(**compiler_kwargs),
        cost_estimate=cost,
    )(x_flat, *weight_operands)


def init_params(key, inputs_size, n_features):
    """Deterministic init mirroring nn.Linear shapes (weights stored as (in, out))."""
    n0, n1 = n_features
    dims = [(inputs_size, n0), (n0, n1), (n1, n0), (n0, inputs_size)]
    params = []
    for d_in, d_out in dims:
        key, kw, kb = jax.random.split(key, 3)
        bound = 1.0 / jnp.sqrt(jnp.float32(d_in))
        w = jax.random.uniform(kw, (d_in, d_out), jnp.float32, -bound, bound)
        b = jax.random.uniform(kb, (1, d_out), jnp.float32, -bound, bound)
        params += [w, b]
    return tuple(params)


def reference_forward(x, params):
    """Plain-JAX reference of the PyTorch forward (encode=False)."""
    w1, b1, w2, b2, w3, b3, w4, b4 = params
    B = x.shape[0]
    xf = x.reshape(B, -1)
    h = jnp.maximum(xf @ w1 + b1, 0.0)
    z = h @ w2 + b2
    z = z / jnp.maximum(jnp.linalg.norm(z, axis=1, keepdims=True), 1e-12)
    h2 = jnp.maximum(z @ w3 + b3, 0.0)
    return h2 @ w4 + b4


if __name__ == "__main__":
    # Small shapes consistent with the module: text_length=8, embedding_dim=32
    # -> inputs_size = 256; hidden features (128, 64); batch = 16 (exercises a
    # 2-step batch grid with block_batch=8).
    text_length = 8
    embedding_dim = 32
    n_features = (128, 64)
    batch = 16
    inputs_size = text_length * embedding_dim

    key = jax.random.PRNGKey(0)
    key, kx = jax.random.split(key)
    x = jax.random.normal(kx, (batch, text_length, embedding_dim), jnp.float32)
    params = init_params(key, inputs_size, n_features)

    ref = reference_forward(x, params)

    # f32 path, multi-step batch grid.
    out = jax.block_until_ready(
        character_encoder_forward(x, params, block_batch=8))
    assert out.shape == (batch, inputs_size)
    assert jnp.allclose(out, ref, atol=1e-5, rtol=1e-5)

    # bf16 streaming path (v6e/v7x recommendation): bf16 on the MXU, f32 accumulation.
    out_bf16 = jax.block_until_ready(
        character_encoder_forward(x, params, block_batch=8,
                                  compute_dtype=jnp.bfloat16))
    assert out_bf16.shape == (batch, inputs_size)
    assert jnp.allclose(out_bf16, ref, atol=1e-1, rtol=1e-1)

    print("KERNEL_OK")
</pallas_src>

<mosaic_0001>
module attributes {stable_mosaic.version = 11 : i64} {
  func.func @character_encoder_kernel(%arg0: i32, %arg1: memref<8x256xf32, #tpu.memory_space<vmem>>, %arg2: memref<256x128xf32, #tpu.memory_space<vmem>>, %arg3: memref<1x128xf32, #tpu.memory_space<vmem>>, %arg4: memref<128x64xf32, #tpu.memory_space<vmem>>, %arg5: memref<1x64xf32, #tpu.memory_space<vmem>>, %arg6: memref<64x128xf32, #tpu.memory_space<vmem>>, %arg7: memref<1x128xf32, #tpu.memory_space<vmem>>, %arg8: memref<128x256xf32, #tpu.memory_space<vmem>>, %arg9: memref<1x256xf32, #tpu.memory_space<vmem>>, %arg10: memref<8x256xf32, #tpu.memory_space<vmem>>) attributes {dimension_semantics = [#tpu.dimension_semantics<parallel>], iteration_bounds = array<i64: 2>, scalar_prefetch = 0 : i64, scratch_operands = 0 : i64, tpu.core_type = #tpu.core_type<tc>, window_params = [{transform_indices = @transform_0, window_bounds = array<i64: 8, 256>}, {pipeline_mode = #tpu.pipeline_mode<synchronous>, transform_indices = @transform_1, window_bounds = array<i64: 256, 128>}, {pipeline_mode = #tpu.pipeline_mode<synchronous>, transform_indices = @transform_2, window_bounds = array<i64: 1, 128>}, {pipeline_mode = #tpu.pipeline_mode<synchronous>, transform_indices = @transform_3, window_bounds = array<i64: 128, 64>}, {pipeline_mode = #tpu.pipeline_mode<synchronous>, transform_indices = @transform_4, window_bounds = array<i64: 1, 64>}, {pipeline_mode = #tpu.pipeline_mode<synchronous>, transform_indices = @transform_5, window_bounds = array<i64: 64, 128>}, {pipeline_mode = #tpu.pipeline_mode<synchronous>, transform_indices = @transform_6, window_bounds = array<i64: 1, 128>}, {pipeline_mode = #tpu.pipeline_mode<synchronous>, transform_indices = @transform_7, window_bounds = array<i64: 128, 256>}, {pipeline_mode = #tpu.pipeline_mode<synchronous>, transform_indices = @transform_8, window_bounds = array<i64: 1, 256>}, {transform_indices = @transform_9, window_bounds = array<i64: 8, 256>}]} {
    %c0 = arith.constant 0 : index
    %c0_0 = arith.constant 0 : index
    %0 = vector.load %arg1[%c0, %c0_0] : memref<8x256xf32, #tpu.memory_space<vmem>>, vector<8x256xf32>
    %c0_1 = arith.constant 0 : index
    %c0_2 = arith.constant 0 : index
    %1 = vector.load %arg3[%c0_1, %c0_2] : memref<1x128xf32, #tpu.memory_space<vmem>>, vector<1x128xf32>
    %c0_3 = arith.constant 0 : index
    %c0_4 = arith.constant 0 : index
    %2 = vector.load %arg5[%c0_3, %c0_4] : memref<1x64xf32, #tpu.memory_space<vmem>>, vector<1x64xf32>
    %c0_5 = arith.constant 0 : index
    %c0_6 = arith.constant 0 : index
    %3 = vector.load %arg7[%c0_5, %c0_6] : memref<1x128xf32, #tpu.memory_space<vmem>>, vector<1x128xf32>
    %c0_7 = arith.constant 0 : index
    %c0_8 = arith.constant 0 : index
    %4 = vector.load %arg9[%c0_7, %c0_8] : memref<1x256xf32, #tpu.memory_space<vmem>>, vector<1x256xf32>
    %c0_9 = arith.constant 0 : index
    %c0_10 = arith.constant 0 : index
    %5 = vector.load %arg2[%c0_9, %c0_10] : memref<256x128xf32, #tpu.memory_space<vmem>>, vector<256x128xf32>
    %cst = arith.constant dense<0.000000e+00> : vector<8x128xf32>
    %6 = tpu.matmul %0, %5, %cst {dimension_numbers = #tpu.dot_dimension_numbers<[1], [0], [0], [1], [0, 0, 1, 1], [], []>} : vector<8x256xf32>, vector<256x128xf32>, vector<8x128xf32> -> vector<8x128xf32>
    %7 = vector.broadcast %1 : vector<1x128xf32> to vector<8x128xf32>
    %8 = arith.addf %6, %7 : vector<8x128xf32>
    %cst_11 = arith.constant 0.000000e+00 : f32
    %9 = vector.broadcast %cst_11 : f32 to vector<8x128xf32>
    %10 = arith.maximumf %8, %9 : vector<8x128xf32>
    %c0_12 = arith.constant 0 : index
    %c0_13 = arith.constant 0 : index
    %11 = vector.load %arg4[%c0_12, %c0_13] : memref<128x64xf32, #tpu.memory_space<vmem>>, vector<128x64xf32>
    %cst_14 = arith.constant dense<0.000000e+00> : vector<8x64xf32>
    %12 = tpu.matmul %10, %11, %cst_14 {dimension_numbers = #tpu.dot_dimension_numbers<[1], [0], [0], [1], [0, 0, 1, 1], [], []>} : vector<8x128xf32>, vector<128x64xf32>, vector<8x64xf32> -> vector<8x64xf32>
    %13 = vector.broadcast %2 : vector<1x64xf32> to vector<8x64xf32>
    %14 = arith.addf %12, %13 : vector<8x64xf32>
    %15 = arith.mulf %14, %14 : vector<8x64xf32>
    %cst_15 = arith.constant dense<0.000000e+00> : vector<8xf32>
    %16 = vector.multi_reduction <add>, %15, %cst_15 [1] : vector<8x64xf32> to vector<8xf32>
    %17 = vector.shape_cast %16 : vector<8xf32> to vector<8x1xf32>
    %cst_16 = arith.constant 1.000000e-24 : f32
    %18 = vector.broadcast %cst_16 : f32 to vector<8x1xf32>
    %19 = arith.maximumf %17, %18 : vector<8x1xf32>
    %20 = math.rsqrt %19 : vector<8x1xf32>
    %21 = vector.broadcast %20 : vector<8x1xf32> to vector<8x64xf32>
    %22 = arith.mulf %14, %21 : vector<8x64xf32>
    %c0_17 = arith.constant 0 : index
    %c0_18 = arith.constant 0 : index
    %23 = vector.load %arg6[%c0_17, %c0_18] : memref<64x128xf32, #tpu.memory_space<vmem>>, vector<64x128xf32>
    %cst_19 = arith.constant dense<0.000000e+00> : vector<8x128xf32>
    %24 = tpu.matmul %22, %23, %cst_19 {dimension_numbers = #tpu.dot_dimension_numbers<[1], [0], [0], [1], [0, 0, 1, 1], [], []>} : vector<8x64xf32>, vector<64x128xf32>, vector<8x128xf32> -> vector<8x128xf32>
    %25 = vector.broadcast %3 : vector<1x128xf32> to vector<8x128xf32>
    %26 = arith.addf %24, %25 : vector<8x128xf32>
    %cst_20 = arith.constant 0.000000e+00 : f32
    %27 = vector.broadcast %cst_20 : f32 to vector<8x128xf32>
    %28 = arith.maximumf %26, %27 : vector<8x128xf32>
    %c0_21 = arith.constant 0 : index
    %c0_22 = arith.constant 0 : index
    %29 = vector.load %arg8[%c0_21, %c0_22] : memref<128x256xf32, #tpu.memory_space<vmem>>, vector<128x256xf32>
    %cst_23 = arith.constant dense<0.000000e+00> : vector<8x256xf32>
    %30 = tpu.matmul %28, %29, %cst_23 {dimension_numbers = #tpu.dot_dimension_numbers<[1], [0], [0], [1], [0, 0, 1, 1], [], []>} : vector<8x128xf32>, vector<128x256xf32>, vector<8x256xf32> -> vector<8x256xf32>
    %31 = vector.broadcast %4 : vector<1x256xf32> to vector<8x256xf32>
    %32 = arith.addf %30, %31 : vector<8x256xf32>
    %c0_24 = arith.constant 0 : index
    %c0_25 = arith.constant 0 : index
    %33 = vector.load %arg10[%c0_24, %c0_25] : memref<8x256xf32, #tpu.memory_space<vmem>>, vector<8x256xf32>
    tpu.vector_store %arg10[%c0_24, %c0_25], %32 {strides = array<i32>} : memref<8x256xf32, #tpu.memory_space<vmem>>, vector<8x256xf32>,
    return
  }
  func.func @transform_0(%arg0: i32) -> (i32, i32) {
    %c0_i32 = arith.constant 0 : i32
    %c0_i32_0 = arith.constant 0 : i32
    return %arg0, %c0_i32 : i32, i32
  }
  func.func @transform_1(%arg0: i32) -> (i32, i32) {
    %c0_i32 = arith.constant 0 : i32
    %c0_i32_0 = arith.constant 0 : i32
    %c0_i32_1 = arith.constant 0 : i32
    return %c0_i32, %c0_i32_0 : i32, i32
  }
  func.func @transform_2(%arg0: i32) -> (i32, i32) {
    %c0_i32 = arith.constant 0 : i32
    %c0_i32_0 = arith.constant 0 : i32
    %c0_i32_1 = arith.constant 0 : i32
    return %c0_i32, %c0_i32_0 : i32, i32
  }
  func.func @transform_3(%arg0: i32) -> (i32, i32) {
    %c0_i32 = arith.constant 0 : i32
    %c0_i32_0 = arith.constant 0 : i32
    %c0_i32_1 = arith.constant 0 : i32
    return %c0_i32, %c0_i32_0 : i32, i32
  }
  func.func @transform_4(%arg0: i32) -> (i32, i32) {
    %c0_i32 = arith.constant 0 : i32
    %c0_i32_0 = arith.constant 0 : i32
    %c0_i32_1 = arith.constant 0 : i32
    return %c0_i32, %c0_i32_0 : i32, i32
  }
  func.func @transform_5(%arg0: i32) -> (i32, i32) {
    %c0_i32 = arith.constant 0 : i32
    %c0_i32_0 = arith.constant 0 : i32
    %c0_i32_1 = arith.constant 0 : i32
    return %c0_i32, %c0_i32_0 : i32, i32
  }
  func.func @transform_6(%arg0: i32) -> (i32, i32) {
    %c0_i32 = arith.constant 0 : i32
    %c0_i32_0 = arith.constant 0 : i32
    %c0_i32_1 = arith.constant 0 : i32
    return %c0_i32, %c0_i32_0 : i32, i32
  }
  func.func @transform_7(%arg0: i32) -> (i32, i32) {
    %c0_i32 = arith.constant 0 : i32
    %c0_i32_0 = arith.constant 0 : i32
    %c0_i32_1 = arith.constant 0 : i32
    return %c0_i32, %c0_i32_0 : i32, i32
  }
  func.func @transform_8(%arg0: i32) -> (i32, i32) {
    %c0_i32 = arith.constant 0 : i32
    %c0_i32_0 = arith.constant 0 : i32
    %c0_i32_1 = arith.constant 0 : i32
    return %c0_i32, %c0_i32_0 : i32, i32
  }
  func.func @transform_9(%arg0: i32) -> (i32, i32) {
    %c0_i32 = arith.constant 0 : i32
    %c0_i32_0 = arith.constant 0 : i32
    return %arg0, %c0_i32 : i32, i32
  }
}

</mosaic_0001>

<llo_original>
// kernel: tpu_custom_call.1
$region0: #{tpu_custom_call.1}
  #allocation0 [shape = 'u32[]', space=smem, size = 0x4, offset = 0x4, fixed_abs, tag = 'smem constant byte address 0x4 - core index']
  #allocation1 [shape = 'u32[144,128]{1,0:T(1,128)}', space=vmem, size = 0x12000, scoped, tag = 'internal scratch']
  %s0 = inlined_call_operand.vmem [shape: f32[16,256], index: 0, kind: input, shape index: {}]
  %s1 = inlined_call_operand.hbm [shape: f32[256,128], index: 1, kind: input, shape index: {}]
  %s2 = inlined_call_operand.vmem [shape: f32[1,128], index: 2, kind: input, shape index: {}]
  %s3 = inlined_call_operand.vmem [shape: f32[128,64], index: 3, kind: input, shape index: {}]
  %s4 = inlined_call_operand.vmem [shape: f32[1,64], index: 4, kind: input, shape index: {}]
  %s5 = inlined_call_operand.vmem [shape: f32[64,128], index: 5, kind: input, shape index: {}]
  %s6 = inlined_call_operand.vmem [shape: f32[1,128], index: 6, kind: input, shape index: {}]
  %s7 = inlined_call_operand.hbm [shape: f32[128,256], index: 7, kind: input, shape index: {}]
  %s8 = inlined_call_operand.vmem [shape: f32[1,256], index: 8, kind: input, shape index: {}]
  %s9 = inlined_call_operand.hbm [shape: f32[16,256], index: 9, kind: output, shape index: {}]
  %s10 = sld [smem:[#allocation0]]
  $region77: #{tpu_custom_call.1} parent=0
    _
  %s12 = ssub.s32 1, %s10
  %s13 = scalar_select 0, %s12, %s10
  $region1: #{tpu_custom_call.1} parent=0
    #allocation2 [shape = 'u8[131072]{0}', space=vmem, size = 0x20000, scoped, tag = 'input window, operand 1, single buffered']
    #allocation3 [shape = 's32[2]{0}', space=sflag, size = 0x8, scoped, tag = 'scoped memory for tpu_custom_call.1']
    #allocation4 [shape = 's32[2]{0}', space=sflag, size = 0x8, scoped, tag = 'scoped memory for tpu_custom_call.1']
    #allocation5 [shape = 'u8[131072]{0}', space=vmem, size = 0x20000, scoped, tag = 'input window, operand 7, single buffered']
    #allocation6 [shape = 's32[1]{0}', space=sflag, size = 0x4, scoped, tag = 'scoped memory for tpu_custom_call.1']
    #allocation7 [shape = 'u8[16384]{0}', space=vmem, size = 0x4000, scoped, tag = 'output window, operand 0']
    %14 = vsyncpa [#allocation3], 0
    %15 = vsyncpa [#allocation6], 0
    %16 = vsyncpa [#allocation4], 0
    %s17 = scalar_lea.sflag [#allocation4], 1
    %18 = vsyncpa %s17, 0
    loop: start=0, step=1, limit=4
    $region2: #{tpu_custom_call.1} parent=1 // loop_pre_header
      _
    $region3: #{tpu_custom_call.1} parent=1 // loop_header
      %s20 = sphi 0, %s24
      %p21 = scmp.ge.s32.totalorder %s20, 4
      %s30 = sphi 0, %s32
      %s33 = sphi 0, %s30
      %s34 = sphi 0, %s33
      %s50 = sphi 0, %s34
      %s54 = sphi 0, %s54
      %s56 = sphi 0, %s54
      %s57 = sphi 0, %s56
      %s71 = sphi 0, %s57
      %s75 = sphi 0, %s75
      %s77 = sphi 0, %s75
      %s78 = sphi 0, %s77
      %s92 = sphi 0, %s78
      %s96 = sphi 0, %s96
      %s98 = sphi 0, %s96
      %s99 = sphi 0, %s98
      %s113 = sphi 0, %s99
      %s117 = sphi 0, %s117
      %s119 = sphi 0, %s117
      %s120 = sphi 0, %s119
      %s134 = sphi 0, %s120
      %s138 = sphi 0, %s138
      %s140 = sphi 0, %s138
      %s141 = sphi 0, %s140
      %s155 = sphi 0, %s141
      %s159 = sphi 0, %s159
      %s161 = sphi 0, %s159
      %s162 = sphi 0, %s161
      %s176 = sphi 0, %s162
      %s180 = sphi 0, %s180
      %s182 = sphi 0, %s180
      %s183 = sphi 0, %s182
      %s197 = sphi 0, %s183
      %s201 = sphi 0, %s201
      %s203 = sphi 0, %s201
      %s204 = sphi 0, %s203
      %s218 = sphi 0, %s204
      %s224 = sphi 0, %s226
      %s227 = sphi 0, %s224
      %s228 = sphi 0, %s227
      %s244 = sphi 0, %s228
    $region4: #{tpu_custom_call.1} parent=1 // loop_header_branch
      %23 = sbr.rel (%p21) target = $region8
    $region5: #{tpu_custom_call.1} parent=1 // loop_body
      %s25 = ssub.s32 %s20, 1
      %s26 = ssub.s32 %s20, 2
      %s27 = sadd.s32 %s20, 1
      %s28 = ssub.s32 %s20, %s27
      %p29 = scmp.eq.s32.totalorder %s28, 0
      %s31 = sadd.s32 %s30, 1
      %s32 = scalar_select %p29, %s30, %s31
      %p35 = pneg %p29
      %p36 = scmp.eq.s32.totalorder %s20, 1
      %p37 = por %p35, %p36
      %p38 = scmp.ne.s32.totalorder %s30, %s33
      %p39 = scmp.eq.s32.totalorder %s20, 0
      %p40 = por %p38, %p39
      %p41 = scmp.ne.s32.totalorder %s30, %s33
      %p42 = scmp.eq.s32.totalorder %s25, 1
      %p43 = por %p41, %p42
      %p44 = scmp.ne.s32.totalorder %s33, %s34
      %p45 = scmp.eq.s32.totalorder %s25, 0
      %p46 = por %p44, %p45
      %p47 = scmp.ne.s32.totalorder %s33, %s34
      %p48 = scmp.eq.s32.totalorder %s26, 1
      %p49 = por %p47, %p48
      %p51 = scmp.ne.s32.totalorder %s34, %s50
      %p52 = scmp.eq.s32.totalorder %s26, 0
      %p53 = por %p51, %p52
      %s55 = sadd.s32 %s54, 1
      %p58 = scmp.eq.s32.totalorder %s20, 1
      %p59 = scmp.ne.s32.totalorder %s54, %s56
      %p60 = scmp.eq.s32.totalorder %s20, 0
      %p61 = por %p59, %p60
      %p62 = scmp.ne.s32.totalorder %s54, %s56
      %p63 = scmp.eq.s32.totalorder %s25, 1
      %p64 = por %p62, %p63
      %p65 = scmp.ne.s32.totalorder %s56, %s57
      %p66 = scmp.eq.s32.totalorder %s25, 0
      %p67 = por %p65, %p66
      %p68 = scmp.ne.s32.totalorder %s56, %s57
      %p69 = scmp.eq.s32.totalorder %s26, 1
      %p70 = por %p68, %p69
      %p72 = scmp.ne.s32.totalorder %s57, %s71
      %p73 = scmp.eq.s32.totalorder %s26, 0
      %p74 = por %p72, %p73
      %s76 = sadd.s32 %s75, 1
      %p79 = scmp.eq.s32.totalorder %s20, 1
      %p80 = scmp.ne.s32.totalorder %s75, %s77
      %p81 = scmp.eq.s32.totalorder %s20, 0
      %p82 = por %p80, %p81
      %p83 = scmp.ne.s32.totalorder %s75, %s77
      %p84 = scmp.eq.s32.totalorder %s25, 1
      %p85 = por %p83, %p84
      %p86 = scmp.ne.s32.totalorder %s77, %s78
      %p87 = scmp.eq.s32.totalorder %s25, 0
      %p88 = por %p86, %p87
      %p89 = scmp.ne.s32.totalorder %s77, %s78
      %p90 = scmp.eq.s32.totalorder %s26, 1
      %p91 = por %p89, %p90
      %p93 = scmp.ne.s32.totalorder %s78, %s92
      %p94 = scmp.eq.s32.totalorder %s26, 0
      %p95 = por %p93, %p94
      %s97 = sadd.s32 %s96, 1
      %p100 = scmp.eq.s32.totalorder %s20, 1
      %p101 = scmp.ne.s32.totalorder %s96, %s98
      %p102 = scmp.eq.s32.totalorder %s20, 0
      %p103 = por %p101, %p102
      %p104 = scmp.ne.s32.totalorder %s96, %s98
      %p105 = scmp.eq.s32.totalorder %s25, 1
      %p106 = por %p104, %p105
      %p107 = scmp.ne.s32.totalorder %s98, %s99
      %p108 = scmp.eq.s32.totalorder %s25, 0
      %p109 = por %p107, %p108
      %p110 = scmp.ne.s32.totalorder %s98, %s99
      %p111 = scmp.eq.s32.totalorder %s26, 1
      %p112 = por %p110, %p111
      %p114 = scmp.ne.s32.totalorder %s99, %s113
      %p115 = scmp.eq.s32.totalorder %s26, 0
      %p116 = por %p114, %p115
      %s118 = sadd.s32 %s117, 1
      %p121 = scmp.eq.s32.totalorder %s20, 1
      %p122 = scmp.ne.s32.totalorder %s117, %s119
      %p123 = scmp.eq.s32.totalorder %s20, 0
      %p124 = por %p122, %p123
      %p125 = scmp.ne.s32.totalorder %s117, %s119
      %p126 = scmp.eq.s32.totalorder %s25, 1
      %p127 = por %p125, %p126
      %p128 = scmp.ne.s32.totalorder %s119, %s120
      %p129 = scmp.eq.s32.totalorder %s25, 0
      %p130 = por %p128, %p129
      %p131 = scmp.ne.s32.totalorder %s119, %s120
      %p132 = scmp.eq.s32.totalorder %s26, 1
      %p133 = por %p131, %p132
      %p135 = scmp.ne.s32.totalorder %s120, %s134
      %p136 = scmp.eq.s32.totalorder %s26, 0
      %p137 = por %p135, %p136
      %s139 = sadd.s32 %s138, 1
      %p142 = scmp.eq.s32.totalorder %s20, 1
      %p143 = scmp.ne.s32.totalorder %s138, %s140
      %p144 = scmp.eq.s32.totalorder %s20, 0
      %p145 = por %p143, %p144
      %p146 = scmp.ne.s32.totalorder %s138, %s140
      %p147 = scmp.eq.s32.totalorder %s25, 1
      %p148 = por %p146, %p147
      %p149 = scmp.ne.s32.totalorder %s140, %s141
      %p150 = scmp.eq.s32.totalorder %s25, 0
      %p151 = por %p149, %p150
      %p152 = scmp.ne.s32.totalorder %s140, %s141
      %p153 = scmp.eq.s32.totalorder %s26, 1
      %p154 = por %p152, %p153
      %p156 = scmp.ne.s32.totalorder %s141, %s155
      %p157 = scmp.eq.s32.totalorder %s26, 0
      %p158 = por %p156, %p157
      %s160 = sadd.s32 %s159, 1
      %p163 = scmp.eq.s32.totalorder %s20, 1
      %p164 = scmp.ne.s32.totalorder %s159, %s161
      %p165 = scmp.eq.s32.totalorder %s20, 0
      %p166 = por %p164, %p165
      %p167 = scmp.ne.s32.totalorder %s159, %s161
      %p168 = scmp.eq.s32.totalorder %s25, 1
      %p169 = por %p167, %p168
      %p170 = scmp.ne.s32.totalorder %s161, %s162
      %p171 = scmp.eq.s32.totalorder %s25, 0
      %p172 = por %p170, %p171
      %p173 = scmp.ne.s32.totalorder %s161, %s162
      %p174 = scmp.eq.s32.totalorder %s26, 1
      %p175 = por %p173, %p174
      %p177 = scmp.ne.s32.totalorder %s162, %s176
      %p178 = scmp.eq.s32.totalorder %s26, 0
      %p179 = por %p177, %p178
      %s181 = sadd.s32 %s180, 1
      %p184 = scmp.eq.s32.totalorder %s20, 1
      %p185 = scmp.ne.s32.totalorder %s180, %s182
      %p186 = scmp.eq.s32.totalorder %s20, 0
      %p187 = por %p185, %p186
      %p188 = scmp.ne.s32.totalorder %s180, %s182
      %p189 = scmp.eq.s32.totalorder %s25, 1
      %p190 = por %p188, %p189
      %p191 = scmp.ne.s32.totalorder %s182, %s183
      %p192 = scmp.eq.s32.totalorder %s25, 0
      %p193 = por %p191, %p192
      %p194 = scmp.ne.s32.totalorder %s182, %s183
      %p195 = scmp.eq.s32.totalorder %s26, 1
      %p196 = por %p194, %p195
      %p198 = scmp.ne.s32.totalorder %s183, %s197
      %p199 = scmp.eq.s32.totalorder %s26, 0
      %p200 = por %p198, %p199
      %s202 = sadd.s32 %s201, 1
      %p205 = scmp.eq.s32.totalorder %s20, 1
      %p206 = scmp.ne.s32.totalorder %s201, %s203
      %p207 = scmp.eq.s32.totalorder %s20, 0
      %p208 = por %p206, %p207
      %p209 = scmp.ne.s32.totalorder %s201, %s203
      %p210 = scmp.eq.s32.totalorder %s25, 1
      %p211 = por %p209, %p210
      %p212 = scmp.ne.s32.totalorder %s203, %s204
      %p213 = scmp.eq.s32.totalorder %s25, 0
      %p214 = por %p212, %p213
      %p215 = scmp.ne.s32.totalorder %s203, %s204
      %p216 = scmp.eq.s32.totalorder %s26, 1
      %p217 = por %p215, %p216
      %p219 = scmp.ne.s32.totalorder %s204, %s218
      %p220 = scmp.eq.s32.totalorder %s26, 0
      %p221 = por %p219, %p220
      %s222 = ssub.s32 %s20, %s27
      %p223 = scmp.eq.s32.totalorder %s222, 0
      %s225 = sadd.s32 %s224, 1
      %s226 = scalar_select %p223, %s224, %s225
      %p229 = pneg %p223
      %p230 = scmp.eq.s32.totalorder %s20, 1
      %p231 = por %p229, %p230
      %p232 = scmp.ne.s32.totalorder %s224, %s227
      %p233 = scmp.eq.s32.totalorder %s20, 0
      %p234 = por %p232, %p233
      %p235 = scmp.ne.s32.totalorder %s224, %s227
      %p236 = scmp.eq.s32.totalorder %s25, 1
      %p237 = por %p235, %p236
      %p238 = scmp.ne.s32.totalorder %s227, %s228
      %p239 = scmp.eq.s32.totalorder %s25, 0
      %p240 = por %p238, %p239
      %p241 = scmp.ne.s32.totalorder %s227, %s228
      %p242 = scmp.eq.s32.totalorder %s26, 1
      %p243 = por %p241, %p242
      %p245 = scmp.ne.s32.totalorder %s228, %s244
      %p246 = scmp.eq.s32.totalorder %s26, 0
      %p247 = por %p245, %p246
      %p248 = scmp.le.s32.totalorder 1, %s20
      %p249 = scmp.lt.s32.totalorder %s20, 3
      %p250 = pnand %p248, %p249
      %p251 = pneg %p250
      // Predicated region
      $region9: #{tpu_custom_call.1} parent=5 // pred_check
        _
      $region10: #{tpu_custom_call.1} parent=5 // pred_check_branch
        %253 = sbr.rel (%p250) target = $region12
      $region11: #{tpu_custom_call.1} parent=5 // pred_region
        %s254 = ssub.s32 %s20, 1
        // Predicated region
        $region13: #{tpu_custom_call.1} parent=11 // pred_check
          %p255 = pneg %p67
        $region14: #{tpu_custom_call.1} parent=11 // pred_check_branch
          %257 = sbr.rel (%p255) target = $region16
        $region15: #{tpu_custom_call.1} parent=11 // pred_region
          %s259 = ssub.s32 4096, 4096
          %260 = vsyncadd [#allocation3], %s259
          %s261 = sshll.u32 [#allocation2], 4
          %s262 = int_to_ptr.vmem [resolvable:$true] %s261
          %267 = dma.hbm_to_vmem [thread:$0]  %s1, 4096, %s262, [#allocation3], 128, 128, 8
        $region16: #{tpu_custom_call.1} parent=11 // pred_fallthru
          _
        // Predicated region
        $region17: #{tpu_custom_call.1} parent=11 // pred_check
          %p268 = pneg %p88
        $region18: #{tpu_custom_call.1} parent=11 // pred_check_branch
          %270 = sbr.rel (%p268) target = $region20
        $region19: #{tpu_custom_call.1} parent=11 // pred_region
          _
        $region20: #{tpu_custom_call.1} parent=11 // pred_fallthru
          _
        // Predicated region
        $region21: #{tpu_custom_call.1} parent=11 // pred_check
          %p271 = pneg %p109
        $region22: #{tpu_custom_call.1} parent=11 // pred_check_branch
          %273 = sbr.rel (%p271) target = $region24
        $region23: #{tpu_custom_call.1} parent=11 // pred_region
          _
        $region24: #{tpu_custom_call.1} parent=11 // pred_fallthru
          _
        // Predicated region
        $region25: #{tpu_custom_call.1} parent=11 // pred_check
          %p274 = pneg %p130
        $region26: #{tpu_custom_call.1} parent=11 // pred_check_branch
          %276 = sbr.rel (%p274) target = $region28
        $region27: #{tpu_custom_call.1} parent=11 // pred_region
          _
        $region28: #{tpu_custom_call.1} parent=11 // pred_fallthru
          _
        // Predicated region
        $region29: #{tpu_custom_call.1} parent=11 // pred_check
          %p277 = pneg %p151
        $region30: #{tpu_custom_call.1} parent=11 // pred_check_branch
          %279 = sbr.rel (%p277) target = $region32
        $region31: #{tpu_custom_call.1} parent=11 // pred_region
          _
        $region32: #{tpu_custom_call.1} parent=11 // pred_fallthru
          _
        // Predicated region
        $region33: #{tpu_custom_call.1} parent=11 // pred_check
          %p280 = pneg %p172
        $region34: #{tpu_custom_call.1} parent=11 // pred_check_branch
          %282 = sbr.rel (%p280) target = $region36
        $region35: #{tpu_custom_call.1} parent=11 // pred_region
          _
        $region36: #{tpu_custom_call.1} parent=11 // pred_fallthru
          _
        // Predicated region
        $region37: #{tpu_custom_call.1} parent=11 // pred_check
          %p283 = pneg %p193
        $region38: #{tpu_custom_call.1} parent=11 // pred_check_branch
          %285 = sbr.rel (%p283) target = $region40
        $region39: #{tpu_custom_call.1} parent=11 // pred_region
          %s287 = ssub.s32 4096, 4096
          %288 = vsyncadd [#allocation6], %s287
          %s289 = sshll.u32 [#allocation5], 4
          %s290 = int_to_ptr.vmem [resolvable:$true] %s289
          %295 = dma.hbm_to_vmem [thread:$0]  %s7, 4096, %s290, [#allocation6], 256, 256, 16
        $region40: #{tpu_custom_call.1} parent=11 // pred_fallthru
          _
        // Predicated region
        $region41: #{tpu_custom_call.1} parent=11 // pred_check
          %p296 = pneg %p214
        $region42: #{tpu_custom_call.1} parent=11 // pred_check_branch
          %298 = sbr.rel (%p296) target = $region44
        $region43: #{tpu_custom_call.1} parent=11 // pred_region
          _
        $region44: #{tpu_custom_call.1} parent=11 // pred_fallthru
          _
      $region12: #{tpu_custom_call.1} parent=5 // pred_fallthru
        _
      %p299 = scmp.lt.s32.totalorder %s20, 2
      // Predicated region
      $region45: #{tpu_custom_call.1} parent=5 // pred_check
        %p300 = pneg %p299
      $region46: #{tpu_custom_call.1} parent=5 // pred_check_branch
        %302 = sbr.rel (%p300) target = $region48
      $region47: #{tpu_custom_call.1} parent=5 // pred_region
        // Predicated region
        $region49: #{tpu_custom_call.1} parent=47 // pred_check
          %p303 = pneg %p40
        $region50: #{tpu_custom_call.1} parent=47 // pred_check_branch
          %305 = sbr.rel (%p303) target = $region52
        $region51: #{tpu_custom_call.1} parent=47 // pred_region
          %p306 = scmp.lt.s32.totalorder %s20, 1
          %s307 = scalar_select %p306, %s20, 1
          %s308 = smul.addr %s307, 2
          %s309 = smul.addr %s308, 8
          %s310 = scalar_lea.vmem %s0, %s309
        $region52: #{tpu_custom_call.1} parent=47 // pred_fallthru
          _
      $region48: #{tpu_custom_call.1} parent=5 // pred_fallthru
        _
      %p311 = scmp.le.s32.totalorder 1, %s20
      %p312 = scmp.lt.s32.totalorder %s20, 3
      %p313 = pnand %p311, %p312
      %p314 = pneg %p313
      // Predicated region
      $region53: #{tpu_custom_call.1} parent=5 // pred_check
        _
      $region54: #{tpu_custom_call.1} parent=5 // pred_check_branch
        %316 = sbr.rel (%p313) target = $region56
      $region55: #{tpu_custom_call.1} parent=5 // pred_region
        %s317 = ssub.s32 %s20, 1
        // Predicated region
        $region57: #{tpu_custom_call.1} parent=55 // pred_check
          %p318 = pneg %p67
        $region58: #{tpu_custom_call.1} parent=55 // pred_check_branch
          %320 = sbr.rel (%p318) target = $region60
        $region59: #{tpu_custom_call.1} parent=55 // pred_region
          %321 = dma.done [#allocation3], 4096
        $region60: #{tpu_custom_call.1} parent=55 // pred_fallthru
          _
        // Predicated region
        $region61: #{tpu_custom_call.1} parent=55 // pred_check
          %p322 = pneg %p193
        $region62: #{tpu_custom_call.1} parent=55 // pred_check_branch
          %324 = sbr.rel (%p322) target = $region64
        $region63: #{tpu_custom_call.1} parent=55 // pred_region
          %325 = dma.done [#allocation6], 4096
        $region64: #{tpu_custom_call.1} parent=55 // pred_fallthru
          _
        %p326 = scmp.lt.s32.totalorder %s25, 1
        %s327 = scalar_select %p326, %s25, 1
        %s328 = smul.addr %s327, 2
        %s329 = smul.addr %s328, 8
        %s330 = scalar_lea.vmem %s0, %s329
        %p331 = pneg %p46
        %p332 = pneg %p43
        %p333 = pneg %p67
        %p334 = pneg %p64
        %p335 = pneg %p88
        %p336 = pneg %p85
        %p337 = pneg %p109
        %p338 = pneg %p106
        %p339 = pneg %p130
        %p340 = pneg %p127
        %p341 = pneg %p151
        %p342 = pneg %p148
        %p343 = pneg %p172
        %p344 = pneg %p169
        %p345 = pneg %p193
        %p346 = pneg %p190
        %p347 = pneg %p214
        %p348 = pneg %p211
        %p349 = pneg %p240
        %p350 = pneg %p237
        %s351 = sand.u32 %s227, 1
        %s352 = scalar_lea.sflag [#allocation4], %s351
        %s353 = sand.u32 %s227, 1
        %s354 = smul.addr %s353, 16
        %s355 = scalar_lea.vmem [#allocation7], %s354
        %p356 = scmp.lt.s32.totalorder %s25, 1
        %s357 = scalar_select %p356, %s25, 1
        %s358 = smul.addr %s357, 2
        %s359 = smul.addr %s358, 8
        %s360 = scalar_lea.vmem %s0, %s359
        %v361 = vld [vmem:[%s360] sm:$0xff]
        %v362 = vld [vmem:[%s360 + $0x8] sm:$0xff]
        %v363 = vld [vmem:[%s2] sm:$0x1]
        %v364 = vld [vmem:[%s4] sm:$0x1]
        %v365 = vld [vmem:[%s6] sm:$0x1]
        %v366 = vld [vmem:[%s8] sm:$0x3]
        %v367 = vld [vmem:[#allocation2] sm:$0xff]
        %v368 = vld [vmem:[#allocation2 + $0x8] sm:$0xff]
        %v369 = vld [vmem:[#allocation2 + $0x10] sm:$0xff]
        %v370 = vld [vmem:[#allocation2 + $0x18] sm:$0xff]
        %v371 = vld [vmem:[#allocation2 + $0x20] sm:$0xff]
        %v372 = vld [vmem:[#allocation2 + $0x28] sm:$0xff]
        %v373 = vld [vmem:[#allocation2 + $0x30] sm:$0xff]
        %v374 = vld [vmem:[#allocation2 + $0x38] sm:$0xff]
        %v375 = vld [vmem:[#allocation2 + $0x40] sm:$0xff]
        %v376 = vld [vmem:[#allocation2 + $0x48] sm:$0xff]
        %v377 = vld [vmem:[#allocation2 + $0x50] sm:$0xff]
        %v378 = vld [vmem:[#allocation2 + $0x58] sm:$0xff]
        %v379 = vld [vmem:[#allocation2 + $0x60] sm:$0xff]
        %v380 = vld [vmem:[#allocation2 + $0x68] sm:$0xff]
        %v381 = vld [vmem:[#allocation2 + $0x70] sm:$0xff]
        %v382 = vld [vmem:[#allocation2 + $0x78] sm:$0xff]
        %v383 = vld [vmem:[#allocation2 + $0x80] sm:$0xff]
        %v384 = vld [vmem:[#allocation2 + $0x88] sm:$0xff]
        %v385 = vld [vmem:[#allocation2 + $0x90] sm:$0xff]
        %v386 = vld [vmem:[#allocation2 + $0x98] sm:$0xff]
        %v387 = vld [vmem:[#allocation2 + $0xa0] sm:$0xff]
        %v388 = vld [vmem:[#allocation2 + $0xa8] sm:$0xff]
        %v389 = vld [vmem:[#allocation2 + $0xb0] sm:$0xff]
        %v390 = vld [vmem:[#allocation2 + $0xb8] sm:$0xff]
        %v391 = vld [vmem:[#allocation2 + $0xc0] sm:$0xff]
        %v392 = vld [vmem:[#allocation2 + $0xc8] sm:$0xff]
        %v393 = vld [vmem:[#allocation2 + $0xd0] sm:$0xff]
        %v394 = vld [vmem:[#allocation2 + $0xd8] sm:$0xff]
        %v395 = vld [vmem:[#allocation2 + $0xe0] sm:$0xff]
        %v396 = vld [vmem:[#allocation2 + $0xe8] sm:$0xff]
        %v397 = vld [vmem:[#allocation2 + $0xf0] sm:$0xff]
        %v398 = vld [vmem:[#allocation2 + $0xf8] sm:$0xff]
        %v400 = vlaneseq
        %v401 = vshrl.u32 %v400, 7
        %v402 = vsub.s32 0, %v401
        %v403 = vrot.slane %v363, %v402
        %405 = vmatprep.subr.mxu0 0.0
        %406 = vmatpush1.msra.mxu0 %v367
        %407 = vmatprep.subr.mxu0 0.0
        %408 = vmatpush1.msra.mxu0 %v368
        %409 = vmatprep.subr.mxu0 0.0
        %410 = vmatpush1.msra.mxu0 %v369
        %411 = vmatprep.subr.mxu0 0.0
        %412 = vmatpush1.msra.mxu0 %v370
        %413 = vmatprep.subr.mxu0 0.0
        %414 = vmatpush1.msra.mxu0 %v371
        %415 = vmatprep.subr.mxu0 0.0
        %416 = vmatpush1.msra.mxu0 %v372
        %417 = vmatprep.subr.mxu0 0.0
        %418 = vmatpush1.msra.mxu0 %v373
        %419 = vmatprep.subr.mxu0 0.0
        %420 = vmatpush1.msra.mxu0 %v374
        %421 = vmatprep.subr.mxu0 0.0
        %422 = vmatpush1.msra.mxu0 %v375
        %423 = vmatprep.subr.mxu0 0.0
        %424 = vmatpush1.msra.mxu0 %v376
        %425 = vmatprep.subr.mxu0 0.0
        %426 = vmatpush1.msra.mxu0 %v377
        %427 = vmatprep.subr.mxu0 0.0
        %428 = vmatpush1.msra.mxu0 %v378
        %429 = vmatprep.subr.mxu0 0.0
        %430 = vmatpush1.msra.mxu0 %v379
        %431 = vmatprep.subr.mxu0 0.0
        %432 = vmatpush1.msra.mxu0 %v380
        %433 = vmatprep.subr.mxu0 0.0
        %434 = vmatpush1.msra.mxu0 %v381
        %435 = vmatprep.subr.mxu0 0.0
        %436 = vmatpush1.msra.mxu0 %v382
        %437 = vmatprep.subr.mxu0 0.0
        %438 = vmatpush1.msra.mxu0 %v383
        %439 = vmatprep.subr.mxu0 0.0
        %440 = vmatpush1.msra.mxu0 %v384
        %441 = vmatprep.subr.mxu0 0.0
        %442 = vmatpush1.msra.mxu0 %v385
        %443 = vmatprep.subr.mxu0 0.0
        %444 = vmatpush1.msra.mxu0 %v386
        %445 = vmatprep.subr.mxu0 0.0
        %446 = vmatpush1.msra.mxu0 %v387
        %447 = vmatprep.subr.mxu0 0.0
        %448 = vmatpush1.msra.mxu0 %v388
        %449 = vmatprep.subr.mxu0 0.0
        %450 = vmatpush1.msra.mxu0 %v389
        %451 = vmatprep.subr.mxu0 0.0
        %452 = vmatpush1.msra.mxu0 %v390
        %453 = vmatprep.subr.mxu0 0.0
        %454 = vmatpush1.msra.mxu0 %v391
        %455 = vmatprep.subr.mxu0 0.0
        %456 = vmatpush1.msra.mxu0 %v392
        %457 = vmatprep.subr.mxu0 0.0
        %458 = vmatpush1.msra.mxu0 %v393
        %459 = vmatprep.subr.mxu0 0.0
        %460 = vmatpush1.msra.mxu0 %v394
        %461 = vmatprep.subr.mxu0 0.0
        %462 = vmatpush1.msra.mxu0 %v395
        %463 = vmatprep.subr.mxu0 0.0
        %464 = vmatpush1.msra.mxu0 %v396
        %465 = vmatprep.subr.mxu0 0.0
        %466 = vmatpush1.msra.mxu0 %v397
        %467 = vmatprep.subr.mxu0 0.0
        %468 = vmatpush1.msra.mxu0 %v398
        %469 = vmatprep.mubr.f32.mxu0 %v362
        %470 = vmatmul.mubr.f32.gmra.mrb[0].mxu0 %v361
        %v471 = vpop.f32.mrb[0].mxu0
        %v472 = vadd.f32 %v403, %v471
        %v473 = vpop.f32.mrb[0].mxu0
        %474 = vdwg.mxu0
        %v475 = vmax.f32 %v472, 0.0
        %v476 = vld [vmem:[%s3] sm:$0xff]
        %v477 = vld [vmem:[%s3 + $0x8] sm:$0xff]
        %v478 = vld [vmem:[%s3 + $0x10] sm:$0xff]
        %v479 = vld [vmem:[%s3 + $0x18] sm:$0xff]
        %v480 = vld [vmem:[%s3 + $0x20] sm:$0xff]
        %v481 = vld [vmem:[%s3 + $0x28] sm:$0xff]
        %v482 = vld [vmem:[%s3 + $0x30] sm:$0xff]
        %v483 = vld [vmem:[%s3 + $0x38] sm:$0xff]
        %v484 = vld [vmem:[%s3 + $0x40] sm:$0xff]
        %v485 = vld [vmem:[%s3 + $0x48] sm:$0xff]
        %v486 = vld [vmem:[%s3 + $0x50] sm:$0xff]
        %v487 = vld [vmem:[%s3 + $0x58] sm:$0xff]
        %v488 = vld [vmem:[%s3 + $0x60] sm:$0xff]
        %v489 = vld [vmem:[%s3 + $0x68] sm:$0xff]
        %v490 = vld [vmem:[%s3 + $0x70] sm:$0xff]
        %v491 = vld [vmem:[%s3 + $0x78] sm:$0xff]
        %v493 = vlaneseq
        %v494 = vshrl.u32 %v493, 7
        %v495 = vsub.s32 0, %v494
        %v496 = vrot.slane %v364, %v495
        %498 = vmatprep.subr.mxu0 0.0
        %499 = vmatpush1.msra.mxu0 %v476
        %500 = vmatprep.subr.mxu0 0.0
        %501 = vmatpush1.msra.mxu0 %v477
        %502 = vmatprep.subr.mxu0 0.0
        %503 = vmatpush1.msra.mxu0 %v478
        %504 = vmatprep.subr.mxu0 0.0
        %505 = vmatpush1.msra.mxu0 %v479
        %506 = vmatprep.subr.mxu0 0.0
        %507 = vmatpush1.msra.mxu0 %v480
        %508 = vmatprep.subr.mxu0 0.0
        %509 = vmatpush1.msra.mxu0 %v481
        %510 = vmatprep.subr.mxu0 0.0
        %511 = vmatpush1.msra.mxu0 %v482
        %512 = vmatprep.subr.mxu0 0.0
        %513 = vmatpush1.msra.mxu0 %v483
        %514 = vmatprep.subr.mxu0 0.0
        %515 = vmatpush1.msra.mxu0 %v484
        %516 = vmatprep.subr.mxu0 0.0
        %517 = vmatpush1.msra.mxu0 %v485
        %518 = vmatprep.subr.mxu0 0.0
        %519 = vmatpush1.msra.mxu0 %v486
        %520 = vmatprep.subr.mxu0 0.0
        %521 = vmatpush1.msra.mxu0 %v487
        %522 = vmatprep.subr.mxu0 0.0
        %523 = vmatpush1.msra.mxu0 %v488
        %524 = vmatprep.subr.mxu0 0.0
        %525 = vmatpush1.msra.mxu0 %v489
        %526 = vmatprep.subr.mxu0 0.0
        %527 = vmatpush1.msra.mxu0 %v490
        %528 = vmatprep.subr.mxu0 0.0
        %529 = vmatpush1.msra.mxu0 %v491
        %530 = vmatprep.subr.mxu0 0.0
        %531 = vmatpush1.msra.mxu0 0.0
        %532 = vmatprep.subr.mxu0 0.0
        %533 = vmatpush1.msra.mxu0 0.0
        %534 = vmatprep.subr.mxu0 0.0
        %535 = vmatpush1.msra.mxu0 0.0
        %536 = vmatprep.subr.mxu0 0.0
        %537 = vmatpush1.msra.mxu0 0.0
        %538 = vmatprep.subr.mxu0 0.0
        %539 = vmatpush1.msra.mxu0 0.0
        %540 = vmatprep.subr.mxu0 0.0
        %541 = vmatpush1.msra.mxu0 0.0
        %542 = vmatprep.subr.mxu0 0.0
        %543 = vmatpush1.msra.mxu0 0.0
        %544 = vmatprep.subr.mxu0 0.0
        %545 = vmatpush1.msra.mxu0 0.0
        %546 = vmatprep.subr.mxu0 0.0
        %547 = vmatpush1.msra.mxu0 0.0
        %548 = vmatprep.subr.mxu0 0.0
        %549 = vmatpush1.msra.mxu0 0.0
        %550 = vmatprep.subr.mxu0 0.0
        %551 = vmatpush1.msra.mxu0 0.0
        %552 = vmatprep.subr.mxu0 0.0
        %553 = vmatpush1.msra.mxu0 0.0
        %554 = vmatprep.subr.mxu0 0.0
        %555 = vmatpush1.msra.mxu0 0.0
        %556 = vmatprep.subr.mxu0 0.0
        %557 = vmatpush1.msra.mxu0 0.0
        %558 = vmatprep.subr.mxu0 0.0
        %559 = vmatpush1.msra.mxu0 0.0
        %560 = vmatprep.subr.mxu0 0.0
        %561 = vmatpush1.msra.mxu0 0.0
        %562 = vmatprep.mubr.f32.mxu0 0.0
        %563 = vmatmul.mubr.f32.gmra.mrb[0].mxu0 %v475
        %v564 = vpop.f32.mrb[0].mxu0
        %v565 = vadd.f32 %v496, %v564
        %v566 = vpop.f32.mrb[0].mxu0
        %567 = vdwg.mxu0
        %v568 = vmul.f32 %v565, %v565
        %vm569 = vcmask 523264
        %v570 = vsel %vm569, %v568, 0.0
        %571 = vadd.xlane.f32.xlu0 %v570
        %v572 = vpop.xlane.xlu0 %571
        %v573 = vmax.f32 %v572, 1e-24
        %v574 = vrsqrt.pop %v573
        %v575 = vmul.f32 %v565, %v574
        %v576 = vld [vmem:[%s5] sm:$0xff]
        %v577 = vld [vmem:[%s5 + $0x8] sm:$0xff]
        %v578 = vld [vmem:[%s5 + $0x10] sm:$0xff]
        %v579 = vld [vmem:[%s5 + $0x18] sm:$0xff]
        %v580 = vld [vmem:[%s5 + $0x20] sm:$0xff]
        %v581 = vld [vmem:[%s5 + $0x28] sm:$0xff]
        %v582 = vld [vmem:[%s5 + $0x30] sm:$0xff]
        %v583 = vld [vmem:[%s5 + $0x38] sm:$0xff]
        %v585 = vlaneseq
        %v586 = vshrl.u32 %v585, 7
        %v587 = vsub.s32 0, %v586
        %v588 = vrot.slane %v365, %v587
        %v591 = vsel %vm569, %v575, 0
        %593 = vmatprep.subr.mxu0 0.0
        %594 = vmatpush1.msra.mxu0 %v576
        %595 = vmatprep.subr.mxu0 0.0
        %596 = vmatpush1.msra.mxu0 %v577
        %597 = vmatprep.subr.mxu0 0.0
        %598 = vmatpush1.msra.mxu0 %v578
        %599 = vmatprep.subr.mxu0 0.0
        %600 = vmatpush1.msra.mxu0 %v579
        %601 = vmatprep.subr.mxu0 0.0
        %602 = vmatpush1.msra.mxu0 %v580
        %603 = vmatprep.subr.mxu0 0.0
        %604 = vmatpush1.msra.mxu0 %v581
        %605 = vmatprep.subr.mxu0 0.0
        %606 = vmatpush1.msra.mxu0 %v582
        %607 = vmatprep.subr.mxu0 0.0
        %608 = vmatpush1.msra.mxu0 %v583
        %609 = vmatprep.subr.mxu0 0.0
        %610 = vmatpush1.msra.mxu0 0.0
        %611 = vmatprep.subr.mxu0 0.0
        %612 = vmatpush1.msra.mxu0 0.0
        %613 = vmatprep.subr.mxu0 0.0
        %614 = vmatpush1.msra.mxu0 0.0
        %615 = vmatprep.subr.mxu0 0.0
        %616 = vmatpush1.msra.mxu0 0.0
        %617 = vmatprep.subr.mxu0 0.0
        %618 = vmatpush1.msra.mxu0 0.0
        %619 = vmatprep.subr.mxu0 0.0
        %620 = vmatpush1.msra.mxu0 0.0
        %621 = vmatprep.subr.mxu0 0.0
        %622 = vmatpush1.msra.mxu0 0.0
        %623 = vmatprep.subr.mxu0 0.0
        %624 = vmatpush1.msra.mxu0 0.0
        %625 = vmatprep.subr.mxu0 0.0
        %626 = vmatpush1.msra.mxu0 0.0
        %627 = vmatprep.subr.mxu0 0.0
        %628 = vmatpush1.msra.mxu0 0.0
        %629 = vmatprep.subr.mxu0 0.0
        %630 = vmatpush1.msra.mxu0 0.0
        %631 = vmatprep.subr.mxu0 0.0
        %632 = vmatpush1.msra.mxu0 0.0
        %633 = vmatprep.subr.mxu0 0.0
        %634 = vmatpush1.msra.mxu0 0.0
        %635 = vmatprep.subr.mxu0 0.0
        %636 = vmatpush1.msra.mxu0 0.0
        %637 = vmatprep.subr.mxu0 0.0
        %638 = vmatpush1.msra.mxu0 0.0
        %639 = vmatprep.subr.mxu0 0.0
        %640 = vmatpush1.msra.mxu0 0.0
        %641 = vmatprep.subr.mxu0 0.0
        %642 = vmatpush1.msra.mxu0 0.0
        %643 = vmatprep.subr.mxu0 0.0
        %644 = vmatpush1.msra.mxu0 0.0
        %645 = vmatprep.subr.mxu0 0.0
        %646 = vmatpush1.msra.mxu0 0.0
        %647 = vmatprep.subr.mxu0 0.0
        %648 = vmatpush1.msra.mxu0 0.0
        %649 = vmatprep.subr.mxu0 0.0
        %650 = vmatpush1.msra.mxu0 0.0
        %651 = vmatprep.subr.mxu0 0.0
        %652 = vmatpush1.msra.mxu0 0.0
        %653 = vmatprep.subr.mxu0 0.0
        %654 = vmatpush1.msra.mxu0 0.0
        %655 = vmatprep.subr.mxu0 0.0
        %656 = vmatpush1.msra.mxu0 0.0
        %657 = vmatprep.mubr.f32.mxu0 0.0
        %658 = vmatmul.mubr.f32.gmra.mrb[0].mxu0 %v591
        %v659 = vpop.f32.mrb[0].mxu0
        %v660 = vadd.f32 %v588, %v659
        %v661 = vpop.f32.mrb[0].mxu0
        %662 = vdwg.mxu0
        %v663 = vmax.f32 %v660, 0.0
        %v664 = vld [vmem:[#allocation5] sm:$0xff]
        %v665 = vld [vmem:[#allocation5 + $0x8] sm:$0xff]
        %v666 = vld [vmem:[#allocation5 + $0x10] sm:$0xff]
        %v667 = vld [vmem:[#allocation5 + $0x18] sm:$0xff]
        %v668 = vld [vmem:[#allocation5 + $0x20] sm:$0xff]
        %v669 = vld [vmem:[#allocation5 + $0x28] sm:$0xff]
        %v670 = vld [vmem:[#allocation5 + $0x30] sm:$0xff]
        %v671 = vld [vmem:[#allocation5 + $0x38] sm:$0xff]
        %v672 = vld [vmem:[#allocation5 + $0x40] sm:$0xff]
        %v673 = vld [vmem:[#allocation5 + $0x48] sm:$0xff]
        %v674 = vld [vmem:[#allocation5 + $0x50] sm:$0xff]
        %v675 = vld [vmem:[#allocation5 + $0x58] sm:$0xff]
        %v676 = vld [vmem:[#allocation5 + $0x60] sm:$0xff]
        %v677 = vld [vmem:[#allocation5 + $0x68] sm:$0xff]
        %v678 = vld [vmem:[#allocation5 + $0x70] sm:$0xff]
        %v679 = vld [vmem:[#allocation5 + $0x78] sm:$0xff]
        %v680 = vld [vmem:[#allocation5 + $0x80] sm:$0xff]
        %v681 = vld [vmem:[#allocation5 + $0x88] sm:$0xff]
        %v682 = vld [vmem:[#allocation5 + $0x90] sm:$0xff]
        %v683 = vld [vmem:[#allocation5 + $0x98] sm:$0xff]
        %v684 = vld [vmem:[#allocation5 + $0xa0] sm:$0xff]
        %v685 = vld [vmem:[#allocation5 + $0xa8] sm:$0xff]
        %v686 = vld [vmem:[#allocation5 + $0xb0] sm:$0xff]
        %v687 = vld [vmem:[#allocation5 + $0xb8] sm:$0xff]
        %v688 = vld [vmem:[#allocation5 + $0xc0] sm:$0xff]
        %v689 = vld [vmem:[#allocation5 + $0xc8] sm:$0xff]
        %v690 = vld [vmem:[#allocation5 + $0xd0] sm:$0xff]
        %v691 = vld [vmem:[#allocation5 + $0xd8] sm:$0xff]
        %v692 = vld [vmem:[#allocation5 + $0xe0] sm:$0xff]
        %v693 = vld [vmem:[#allocation5 + $0xe8] sm:$0xff]
        %v694 = vld [vmem:[#allocation5 + $0xf0] sm:$0xff]
        %v695 = vld [vmem:[#allocation5 + $0xf8] sm:$0xff]
        %v697 = vlaneseq
        %v698 = vshrl.u32 %v697, 7
        %v699 = vsub.s32 0, %v698
        %v700 = vrot.slane %v366, %v699
        %v701 = vlaneseq
        %v702 = vshrl.u32 %v701, 7
        %v703 = vsub.s32 1, %v702
        %v704 = vrot.slane %v366, %v703
        %707 = vmatprep.subr.mxu0 %v665
        %708 = vmatpush1.msra.mxu0 %v664
        %709 = vmatprep.subr.mxu0 %v667
        %710 = vmatpush1.msra.mxu0 %v666
        %711 = vmatprep.subr.mxu0 %v669
        %712 = vmatpush1.msra.mxu0 %v668
        %713 = vmatprep.subr.mxu0 %v671
        %714 = vmatpush1.msra.mxu0 %v670
        %715 = vmatprep.subr.mxu0 %v673
        %716 = vmatpush1.msra.mxu0 %v672
        %717 = vmatprep.subr.mxu0 %v675
        %718 = vmatpush1.msra.mxu0 %v674
        %719 = vmatprep.subr.mxu0 %v677
        %720 = vmatpush1.msra.mxu0 %v676
        %721 = vmatprep.subr.mxu0 %v679
        %722 = vmatpush1.msra.mxu0 %v678
        %723 = vmatprep.subr.mxu0 %v681
        %724 = vmatpush1.msra.mxu0 %v680
        %725 = vmatprep.subr.mxu0 %v683
        %726 = vmatpush1.msra.mxu0 %v682
        %727 = vmatprep.subr.mxu0 %v685
        %728 = vmatpush1.msra.mxu0 %v684
        %729 = vmatprep.subr.mxu0 %v687
        %730 = vmatpush1.msra.mxu0 %v686
        %731 = vmatprep.subr.mxu0 %v689
        %732 = vmatpush1.msra.mxu0 %v688
        %733 = vmatprep.subr.mxu0 %v691
        %734 = vmatpush1.msra.mxu0 %v690
        %735 = vmatprep.subr.mxu0 %v693
        %736 = vmatpush1.msra.mxu0 %v692
        %737 = vmatprep.subr.mxu0 %v695
        %738 = vmatpush1.msra.mxu0 %v694
        %739 = vmatprep.subr.mxu0 0.0
        %740 = vmatpush1.msra.mxu0 0.0
        %741 = vmatprep.subr.mxu0 0.0
        %742 = vmatpush1.msra.mxu0 0.0
        %743 = vmatprep.subr.mxu0 0.0
        %744 = vmatpush1.msra.mxu0 0.0
        %745 = vmatprep.subr.mxu0 0.0
        %746 = vmatpush1.msra.mxu0 0.0
        %747 = vmatprep.subr.mxu0 0.0
        %748 = vmatpush1.msra.mxu0 0.0
        %749 = vmatprep.subr.mxu0 0.0
        %750 = vmatpush1.msra.mxu0 0.0
        %751 = vmatprep.subr.mxu0 0.0
        %752 = vmatpush1.msra.mxu0 0.0
        %753 = vmatprep.subr.mxu0 0.0
        %754 = vmatpush1.msra.mxu0 0.0
        %755 = vmatprep.subr.mxu0 0.0
        %756 = vmatpush1.msra.mxu0 0.0
        %757 = vmatprep.subr.mxu0 0.0
        %758 = vmatpush1.msra.mxu0 0.0
        %759 = vmatprep.subr.mxu0 0.0
        %760 = vmatpush1.msra.mxu0 0.0
        %761 = vmatprep.subr.mxu0 0.0
        %762 = vmatpush1.msra.mxu0 0.0
        %763 = vmatprep.subr.mxu0 0.0
        %764 = vmatpush1.msra.mxu0 0.0
        %765 = vmatprep.subr.mxu0 0.0
        %766 = vmatpush1.msra.mxu0 0.0
        %767 = vmatprep.subr.mxu0 0.0
        %768 = vmatpush1.msra.mxu0 0.0
        %769 = vmatprep.subr.mxu0 0.0
        %770 = vmatpush1.msra.mxu0 0.0
        %771 = vmatprep.mubr.f32.mxu0 0.0
        %772 = vmatmul.mubr.f32.gmra.mrb[0].mxu0 %v663
        %v773 = vpop.f32.mrb[0].mxu0
        %v774 = vadd.f32 %v700, %v773
        %v775 = vpop.f32.mrb[0].mxu0
        %v776 = vadd.f32 %v704, %v775
        %777 = vdwg.mxu0
        %778 = vst [vmem:[%s355] sm:$0xff] %v774
        %779 = vst [vmem:[%s355 + $0x8] sm:$0xff] %v776
        %s780 = sand.u32 %s227, 1
        %s781 = scalar_lea.sflag [#allocation4], %s780
        %s782 = sand.u32 %s227, 1
        %s783 = smul.addr %s782, 16
        %s784 = scalar_lea.vmem [#allocation7], %s783
        // Predicated region
        $region65: #{tpu_custom_call.1} parent=55 // pred_check
          %p785 = pneg %p237
        $region66: #{tpu_custom_call.1} parent=55 // pred_check_branch
          %787 = sbr.rel (%p785) target = $region68
        $region67: #{tpu_custom_call.1} parent=55 // pred_region
          %s789 = ssub.s32 256, 256
          %790 = vsyncadd %s781, %s789
          %s791 = smul.addr %s25, 2
          %s792 = smul.addr %s791, 128
          %s793 = scalar_lea.hbm %s9, %s792
          %s795 = sshll.u32 %s784, 4
          %s796 = int_to_ptr.vmem [resolvable:$true] %s795
          %798 = dma.vmem_to_hbm [thread:$0]  %s796, 256, %s793, %s781
        $region68: #{tpu_custom_call.1} parent=55 // pred_fallthru
          _
      $region56: #{tpu_custom_call.1} parent=5 // pred_fallthru
        _
      %p799 = scmp.le.s32.totalorder 2, %s20
      // Predicated region
      $region69: #{tpu_custom_call.1} parent=5 // pred_check
        %p800 = pneg %p799
      $region70: #{tpu_custom_call.1} parent=5 // pred_check_branch
        %802 = sbr.rel (%p800) target = $region72
      $region71: #{tpu_custom_call.1} parent=5 // pred_region
        %s803 = ssub.s32 %s20, 2
        // Predicated region
        $region73: #{tpu_custom_call.1} parent=71 // pred_check
          %p804 = pneg %p243
        $region74: #{tpu_custom_call.1} parent=71 // pred_check_branch
          %806 = sbr.rel (%p804) target = $region76
        $region75: #{tpu_custom_call.1} parent=71 // pred_region
          %s807 = sand.u32 %s228, 1
          %s808 = scalar_lea.sflag [#allocation4], %s807
          %s809 = sand.u32 %s228, 1
          %s810 = smul.addr %s809, 16
          %s811 = scalar_lea.vmem [#allocation7], %s810
          %812 = dma.done %s808, 256
        $region76: #{tpu_custom_call.1} parent=71 // pred_fallthru
          _
      $region72: #{tpu_custom_call.1} parent=5 // pred_fallthru
        _
    $region6: #{tpu_custom_call.1} parent=1 // loop_footer
      %s24 = sadd.s32 1, %s20
    $region7: #{tpu_custom_call.1} parent=1 // loop_footer_branch
      %19 = sbr.rel target = $region3
    $region8: #{tpu_custom_call.1} parent=1 // loop_exit
      _
    %813 = vsyncpa [#allocation3], 1
    %s814 = scalar_lea.sflag [#allocation3], 1
    %815 = vsyncpa %s814, 1
    %816 = vsyncpa [#allocation6], 1
    %817 = vsyncpa [#allocation4], 1
    %s818 = scalar_lea.sflag [#allocation4], 1
    %819 = vsyncpa %s818, 1

</llo_original>
